<compile_context>
chip_gen: v5e
topology: v5e:2x2
jax: 0.10.0
libtpu: 0.0.40
codegen_flags: <defaults>
</compile_context>

<pallas_src>
import functools
import math

import jax
import jax.numpy as jnp
from jax import lax
from jax.experimental import pallas as pl
from jax.experimental.pallas import tpu as pltpu


def _sinusoid_kernel(pos_ref, out_ref, *, padding_idx, half_dim, dim, neg_scale):
    # pos_ref: (B_tile, T_seq)       int32  position ids (padding rows == padding_idx)
    # out_ref: (B_tile, T_seq, dim)  f32/bf16
    pos = pos_ref[...]                                     # (B, T) int32
    pos3 = pos[:, :, None]                                 # (B, T, 1) single relayout
    maskf = (pos3 != padding_idx).astype(jnp.float32)      # (B, T, 1) zero padding rows
    posf = pos3.astype(jnp.float32)                        # exact below 2**24

    # inverse frequencies, generated once per block (half_dim exps: negligible)
    j = lax.broadcasted_iota(jnp.int32, (1, 1, half_dim), 2).astype(jnp.float32)
    inv_freq = jnp.exp(j * neg_scale)                      # (1, 1, H)

    angles = posf * inv_freq                               # (B, T, H) via broadcast

    # half-split: one sin + one cos over half-width, masked on BOTH halves
    out_ref[:, :, 0:half_dim] = (jnp.sin(angles) * maskf).astype(out_ref.dtype)
    out_ref[:, :, half_dim:2 * half_dim] = (jnp.cos(angles) * maskf).astype(out_ref.dtype)
    if dim % 2 == 1:                                       # odd-D zero pad column
        out_ref[:, :, 2 * half_dim:dim] = jnp.zeros(
            (pos.shape[0], pos.shape[1], 1), out_ref.dtype)


def trocr_sinusoidal_positional_embedding(
    input_ids,
    embedding_dim,
    padding_idx,
    past_key_values_length=0,
    *,
    batch_tile=8,
    seq_tile=256,
    out_dtype=jnp.float32,
):
    """input_ids: (bsz, seq_len) int ; returns (bsz, seq_len, embedding_dim)."""
    input_ids = input_ids.astype(jnp.int32)
    bsz, seq_len = input_ids.shape
    dim = int(embedding_dim)
    half_dim = dim // 2
    assert dim >= 2, "embedding_dim must be >= 2"
    # int32 -> f32 positions are exact only below 2**24
    assert int(padding_idx) + 1 + seq_len + int(past_key_values_length) < (1 << 24)

    # ---- plain-JAX glue: position ids (exact integer masked cumsum, O(B*S)) ----
    mask = (input_ids != padding_idx).astype(jnp.int32)
    pos = (jnp.cumsum(mask, axis=1) + past_key_values_length) * mask + padding_idx
    # pos stays 2-D: no lane-padded (.,.,1) layout in HBM / VMEM

    out_itemsize = jnp.dtype(out_dtype).itemsize

    # ---- tile selection (blocks need not divide the array; Pallas masks edges) ----
    b_tile = bsz if bsz <= batch_tile else batch_tile
    if seq_len <= seq_tile:
        t_seq = seq_len                     # full dim -> always a legal block dim
    else:
        t_seq = seq_tile                    # multiple of 128 (pos last block dim)
        # keep the double-buffered out block comfortably inside scoped VMEM
        while t_seq > 128 and 2 * b_tile * t_seq * dim * out_itemsize > (24 << 20):
            t_seq -= 128

    # HF quirk: log(10000)/(half_dim-1) divides by zero for dim in {2,3}; guard it
    # (diverges from the NaN the reference module would produce in that case).
    neg_scale = -(math.log(10000.0) / max(half_dim - 1, 1))

    grid = (pl.cdiv(bsz, b_tile), pl.cdiv(seq_len, t_seq))

    # explicit scoped-VMEM budget: double-buffered out + pos blocks + headroom
    out_block = b_tile * t_seq * dim * out_itemsize
    pos_block = b_tile * max(t_seq, 128) * 4
    vmem_limit = int(min(max(2 * (out_block + pos_block) + (4 << 20), 32 << 20),
                         48 << 20))

    kernel = functools.partial(
        _sinusoid_kernel,
        padding_idx=int(padding_idx),
        half_dim=half_dim,
        dim=dim,
        neg_scale=neg_scale,
    )

    out = pl.pallas_call(
        kernel,
        out_shape=jax.ShapeDtypeStruct((bsz, seq_len, dim), out_dtype),
        grid_spec=pltpu.PrefetchScalarGridSpec(
            num_scalar_prefetch=0,
            grid=grid,
            in_specs=[pl.BlockSpec((b_tile, t_seq), lambda bi, si: (bi, si))],
            out_specs=pl.BlockSpec((b_tile, t_seq, dim), lambda bi, si: (bi, si, 0)),
        ),
        compiler_params=pltpu.CompilerParams(
            dimension_semantics=("parallel", "parallel"),
            vmem_limit_bytes=vmem_limit,
        ),
    )(pos)
    return out


# ----------------------- reference (mirrors the PyTorch module) -----------------------
def make_sinusoidal_table(num_embeddings, embedding_dim, padding_idx=None):
    half_dim = embedding_dim // 2
    scale = math.log(10000.0) / (half_dim - 1)
    freqs = jnp.exp(jnp.arange(half_dim, dtype=jnp.float32) * -scale)
    angles = jnp.arange(num_embeddings, dtype=jnp.float32)[:, None] * freqs[None, :]
    emb = jnp.concatenate([jnp.sin(angles), jnp.cos(angles)], axis=1)
    if embedding_dim % 2 == 1:
        emb = jnp.concatenate([emb, jnp.zeros((num_embeddings, 1), jnp.float32)], axis=1)
    if padding_idx is not None:
        emb = emb.at[padding_idx, :].set(0.0)
    return emb.astype(jnp.float32)


def _reference(input_ids, weights, padding_idx, past_key_values_length=0):
    mask = (input_ids != padding_idx).astype(jnp.int32)
    pos = (jnp.cumsum(mask, axis=1) + past_key_values_length) * mask + padding_idx
    return weights[pos.reshape(-1)].reshape(input_ids.shape[0], input_ids.shape[1], -1)


if __name__ == "__main__":
    key = jax.random.PRNGKey(0)
    k1, k2 = jax.random.split(key)

    # --- case 1: small shapes implied by the module forward (bsz=2, seq=8, dim=32) ---
    bsz, seq_len, dim, padding_idx, past = 2, 8, 32, 1, 0
    ids1 = jax.random.randint(k1, (bsz, seq_len), 0, 5, dtype=jnp.int32)  # contains pads (==1)
    out1 = jax.block_until_ready(
        trocr_sinusoidal_positional_embedding(ids1, dim, padding_idx, past)
    )
    w1 = make_sinusoidal_table(padding_idx + 1 + seq_len + past, dim, padding_idx)
    ref1 = _reference(ids1, w1, padding_idx, past)
    assert out1.shape == (bsz, seq_len, dim)
    assert jnp.allclose(out1, ref1, atol=5e-4, rtol=5e-4), "case 1 mismatch vs reference"

    # --- case 2: non-divisible S (300 vs t_seq=256, ragged boundary block), odd dim,
    #             past_kv_len and an all-padding row ---
    bsz, seq_len, dim, padding_idx, past = 4, 300, 33, 1, 5
    ids2 = jax.random.randint(k2, (bsz, seq_len), 0, 6, dtype=jnp.int32)
    ids2 = ids2.at[2, :].set(padding_idx)                 # one all-padding row
    out2 = jax.block_until_ready(
        trocr_sinusoidal_positional_embedding(ids2, dim, padding_idx, past)
    )
    w2 = make_sinusoidal_table(padding_idx + 2 + seq_len + past, dim, padding_idx)
    ref2 = _reference(ids2, w2, padding_idx, past)
    assert out2.shape == (bsz, seq_len, dim)
    assert jnp.allclose(out2, ref2, atol=5e-4, rtol=5e-4), "case 2 mismatch vs reference"

    print("KERNEL_OK")
</pallas_src>

<mosaic_0001>
module attributes {stable_mosaic.version = 11 : i64} {
  func.func @_sinusoid_kernel(%arg0: i32, %arg1: i32, %arg2: memref<2x8xi32, #tpu.memory_space<vmem>>, %arg3: memref<2x8x32xf32, #tpu.memory_space<vmem>>) attributes {dimension_semantics = [#tpu.dimension_semantics<parallel>, #tpu.dimension_semantics<parallel>], iteration_bounds = array<i64: 1, 1>, scalar_prefetch = 0 : i64, scratch_operands = 0 : i64, tpu.core_type = #tpu.core_type<tc>, window_params = [{transform_indices = @transform_0, window_bounds = array<i64: 2, 8>}, {transform_indices = @transform_1, window_bounds = array<i64: 2, 8, 32>}]} {
    %c0 = arith.constant 0 : index
    %c0_0 = arith.constant 0 : index
    %0 = vector.load %arg2[%c0, %c0_0] : memref<2x8xi32, #tpu.memory_space<vmem>>, vector<2x8xi32>
    %1 = vector.shape_cast %0 : vector<2x8xi32> to vector<2x8x1xi32>
    %c1_i32 = arith.constant 1 : i32
    %2 = vector.broadcast %c1_i32 : i32 to vector<2x8x1xi32>
    %3 = arith.cmpi ne, %1, %2 : vector<2x8x1xi32>
    %4 = arith.extui %3 : vector<2x8x1xi1> to vector<2x8x1xi32>
    %5 = arith.sitofp %4 : vector<2x8x1xi32> to vector<2x8x1xf32>
    %6 = arith.sitofp %1 : vector<2x8x1xi32> to vector<2x8x1xf32>
    %7 = tpu.iota {dimensions = array<i32: 2>} : vector<1x1x16xi32>
    %8 = arith.sitofp %7 : vector<1x1x16xi32> to vector<1x1x16xf32>
    %cst = arith.constant -0.614022672 : f32
    %9 = vector.broadcast %cst : f32 to vector<1x1x16xf32>
    %10 = arith.mulf %8, %9 : vector<1x1x16xf32>
    %11 = math.exp %10 : vector<1x1x16xf32>
    %12 = vector.broadcast %6 : vector<2x8x1xf32> to vector<2x8x16xf32>
    %13 = vector.broadcast %11 : vector<1x1x16xf32> to vector<2x8x16xf32>
    %14 = arith.mulf %12, %13 : vector<2x8x16xf32>
    %15 = math.sin %14 : vector<2x8x16xf32>
    %16 = vector.broadcast %5 : vector<2x8x1xf32> to vector<2x8x16xf32>
    %17 = arith.mulf %15, %16 : vector<2x8x16xf32>
    %c0_1 = arith.constant 0 : index
    %c0_2 = arith.constant 0 : index
    %c0_3 = arith.constant 0 : index
    %18 = vector.load %arg3[%c0_1, %c0_2, %c0_3] : memref<2x8x32xf32, #tpu.memory_space<vmem>>, vector<2x8x16xf32>
    tpu.vector_store %arg3[%c0_1, %c0_2, %c0_3], %17 {strides = array<i32>} : memref<2x8x32xf32, #tpu.memory_space<vmem>>, vector<2x8x16xf32>,
    %19 = math.cos %14 : vector<2x8x16xf32>
    %20 = vector.broadcast %5 : vector<2x8x1xf32> to vector<2x8x16xf32>
    %21 = arith.mulf %19, %20 : vector<2x8x16xf32>
    %c0_4 = arith.constant 0 : index
    %c0_5 = arith.constant 0 : index
    %c16 = arith.constant 16 : index
    %22 = vector.load %arg3[%c0_4, %c0_5, %c16] : memref<2x8x32xf32, #tpu.memory_space<vmem>>, vector<2x8x16xf32>
    tpu.vector_store %arg3[%c0_4, %c0_5, %c16], %21 {strides = array<i32>} : memref<2x8x32xf32, #tpu.memory_space<vmem>>, vector<2x8x16xf32>,
    return
  }
  func.func @transform_0(%arg0: i32, %arg1: i32) -> (i32, i32) {
    %c0_i32 = arith.constant 0 : i32
    return %arg0, %arg1 : i32, i32
  }
  func.func @transform_1(%arg0: i32, %arg1: i32) -> (i32, i32, i32) {
    %c0_i32 = arith.constant 0 : i32
    %c0_i32_0 = arith.constant 0 : i32
    return %arg0, %arg1, %c0_i32 : i32, i32, i32
  }
}

</mosaic_0001>

<llo_original>
// kernel: tpu_custom_call.1
$region0: #{tpu_custom_call.1}
  #allocation0 [shape = 'u32[]', space=smem, size = 0x4, offset = 0x4, fixed_abs, tag = 'smem constant byte address 0x4 - core index']
  #allocation1 [shape = 'u32[72,128]{1,0:T(1,128)}', space=vmem, size = 0x9000, scoped, tag = 'internal scratch']
  %s0 = inlined_call_operand.hbm [shape: s32[2,8], index: 0, kind: input, shape index: {}]
  %s1 = inlined_call_operand.hbm [shape: f32[2,8,32], index: 1, kind: output, shape index: {}]
  %s2 = sld [smem:[#allocation0]]
  $region18: #{tpu_custom_call.1} parent=0
    _
  %s4 = ssub.s32 1, %s2
  %s5 = scalar_select 0, %s4, %s2
  $region1: #{tpu_custom_call.1} parent=0
    #allocation2 [shape = 'u8[1024]{0}', space=vmem, size = 0x400, scoped, tag = 'input window, operand 0, single buffered']
    #allocation3 [shape = 's32[1]{0}', space=sflag, size = 0x4, scoped, tag = 'scoped memory for tpu_custom_call.1']
    #allocation4 [shape = 's32[1]{0}', space=sflag, size = 0x4, scoped, tag = 'scoped memory for tpu_custom_call.1']
    #allocation5 [shape = 'u8[8192]{0}', space=vmem, size = 0x2000, scoped, tag = 'output window, operand 0, single buffered']
    %6 = vsyncpa [#allocation3], 0
    %7 = vsyncpa [#allocation4], 0
    // Predicated region
    $region2: #{tpu_custom_call.1} parent=1 // pred_check
      _
    $region3: #{tpu_custom_call.1} parent=1 // pred_check_branch
      %9 = sbr.rel (0) target = $region5
    $region4: #{tpu_custom_call.1} parent=1 // pred_region
      %11 = vsyncadd [#allocation3], 0
      %s13 = sshll.u32 %s0, 4
      %s14 = int_to_ptr.hbm [resolvable:$true] %s13
      %s15 = sshll.u32 [#allocation2], 4
      %s16 = int_to_ptr.vmem [resolvable:$true] %s15
      %18 = dma.hbm_to_vmem [thread:$0]  %s14, 32, %s16, [#allocation3]
    $region5: #{tpu_custom_call.1} parent=1 // pred_fallthru
      _
    // Predicated region
    $region6: #{tpu_custom_call.1} parent=1 // pred_check
      _
    $region7: #{tpu_custom_call.1} parent=1 // pred_check_branch
      %20 = sbr.rel (0) target = $region9
    $region8: #{tpu_custom_call.1} parent=1 // pred_region
      %22 = dma.done [#allocation3], 32
    $region9: #{tpu_custom_call.1} parent=1 // pred_fallthru
      _
    %v23 = vld [vmem:[#allocation2] sm:$0x3]
    %v24 = vperm.slane %v23, 0
    %v25 = vlaneseq
    %v26 = vshrl.u32 %v25, 7
    %28 = vset.pattern.permute.xlu0 %v26
    %29 = vperm.xlu0 %28, %v24
    %v30 = vpop.permute.xlu0 %29
    %v31 = vperm.slane %v23, 1
    %v32 = vlaneseq
    %v33 = vshrl.u32 %v32, 7
    %35 = vset.pattern.permute.xlu0 %v33
    %36 = vperm.xlu0 %35, %v31
    %v37 = vpop.permute.xlu0 %36
    %vm38 = vcmp.ne.s32.totalorder %v30, 1
    %vm39 = vcmp.ne.s32.totalorder %v37, 1
    %v40 = vsel %vm38, 1, 0
    %v41 = vsel %vm39, 1, 0
    %v42 = vcvt.s32.f32 %v40
    %v43 = vcvt.s32.f32 %v41
    %v44 = vcvt.s32.f32 %v30
    %v45 = vcvt.s32.f32 %v37
    %v46 = vlaneseq
    %v47 = vand.u32 %v46, 127
    %v48 = vcvt.s32.f32 %v47
    %v49 = vmul.f32 %v48, -0.6140227
    %v50 = vmul.f32 %v49, 1.442695
    %v51 = vpow.pop %v50
    %v52 = vmul.f32 %v44, %v51
    %v53 = vmul.f32 %v45, %v51
    %v54 = vand.u32 2147483647, %v52
    %vm55 = vcmp.le.f32.partialorder %v54, 0.7853982
    %vm56 = vcmp.lt.s32.totalorder %v52, 0
    %v57 = vand.u32 %v52, 2139095040
    %v58 = vshrl.u32 %v57, 23
    %v59 = vsub.s32 %v58, 127
    %v60 = vand.u32 2147483647, %v52
    %v61 = vand.u32 %v60, 8388607
    %v62 = vor.u32 %v61, 8388608
    %v63 = vsub.s32 0, %v62
    %v64 = vadd.s32 %v59, 1
    %vm65 = vcmp.gt.s32.totalorder %v64, 0
    %v66 = vsel %vm65, %v64, 0
    %v67 = vshrl.u32 %v66, 5
    %v68 = vand.u32 %v66, 31
    %v69 = vsub.s32 32, %v68
    %v70 = vshrl.u32 683565275, %v69
    %v71 = vshll.u32 683565275, %v68
    %v72 = vshrl.u32 2475754826, %v69
    %v73 = vor.u32 %v71, %v72
    %v74 = vshll.u32 2475754826, %v68
    %v75 = vshrl.u32 2131351028, %v69
    %v76 = vor.u32 %v74, %v75
    %v77 = vshll.u32 2131351028, %v68
    %v78 = vshrl.u32 2102212464, %v69
    %v79 = vor.u32 %v77, %v78
    %v80 = vshll.u32 2102212464, %v68
    %v81 = vshrl.u32 920167782, %v69
    %v82 = vor.u32 %v80, %v81
    %v83 = vshll.u32 920167782, %v68
    %v84 = vshrl.u32 1326507024, %v69
    %v85 = vor.u32 %v83, %v84
    %vm86 = vcmp.lt.s32.totalorder %v67, 1
    %vm87 = vcmp.lt.s32.totalorder %v67, 2
    %vm88 = vcmp.lt.s32.totalorder %v67, 3
    %vm89 = vcmp.lt.s32.totalorder %v67, 4
    %v90 = vsel %vm86, %v70, %v73
    %v91 = vsel %vm89, %v79, 2102212464
    %v92 = vsel %vm88, %v76, %v91
    %v93 = vsel %vm87, %v90, %v92
    %v94 = vsel %vm86, %v73, %v76
    %v95 = vsel %vm89, %v82, 920167782
    %v96 = vsel %vm88, %v79, %v95
    %v97 = vsel %vm87, %v94, %v96
    %v98 = vsel %vm86, %v76, %v79
    %v99 = vsel %vm89, %v85, 1326507024
    %v100 = vsel %vm88, %v82, %v99
    %v101 = vsel %vm87, %v98, %v100
    %v102 = vshll.u32 %v62, 8
    %v103 = vand.u32 %v102, 65535
    %v104 = vshrl.u32 %v102, 16
    %v105 = vand.u32 %v101, 65535
    %v106 = vshrl.u32 %v101, 16
    %v107 = vmul.u32 %v103, %v105
    %v108 = vmul.u32 %v103, %v106
    %v109 = vmul.u32 %v104, %v105
    %v110 = vmul.u32 %v104, %v106
    %v111 = vshll.u32 %v108, 16
    %v112 = vshrl.u32 %v108, 16
    %v113 = vshll.u32 %v109, 16
    %v114 = vshrl.u32 %v109, 16
    %vm115 = vc.u32 %v107, %v111
    %v116 = vsel %vm115, 1, 0
    %v117 = vadd.s32 %v107, %v111
    %v118 = vadd.s32 %v110, %v116
    %vm119 = vc.u32 %v117, %v113
    %v120 = vsel %vm119, 1, 0
    %v121 = vadd.s32 %v117, %v113
    %v122 = vadd.s32 %v118, %v120
    %v123 = vadd.s32 %v122, %v112
    %v124 = vadd.s32 %v123, %v114
    %v125 = vand.u32 %v102, 65535
    %v126 = vshrl.u32 %v102, 16
    %v127 = vand.u32 %v97, 65535
    %v128 = vshrl.u32 %v97, 16
    %v129 = vmul.u32 %v125, %v127
    %v130 = vmul.u32 %v125, %v128
    %v131 = vmul.u32 %v126, %v127
    %v132 = vmul.u32 %v126, %v128
    %v133 = vshll.u32 %v130, 16
    %v134 = vshrl.u32 %v130, 16
    %v135 = vshll.u32 %v131, 16
    %v136 = vshrl.u32 %v131, 16
    %vm137 = vc.u32 %v129, %v133
    %v138 = vsel %vm137, 1, 0
    %v139 = vadd.s32 %v129, %v133
    %v140 = vadd.s32 %v132, %v138
    %vm141 = vc.u32 %v139, %v135
    %v142 = vsel %vm141, 1, 0
    %v143 = vadd.s32 %v139, %v135
    %v144 = vadd.s32 %v140, %v142
    %v145 = vadd.s32 %v144, %v134
    %v146 = vadd.s32 %v145, %v136
    %v147 = vmul.u32 %v102, %v93
    %v148 = vadd.s32 %v124, %v143
    %vm149 = vc.u32 %v124, %v143
    %v150 = vadd.s32 %v146, 1
    %v151 = vsel %vm149, %v150, %v146
    %v152 = vadd.s32 %v147, %v151
    %v153 = vadd.s32 %v152, 536870912
    %v154 = vshrl.u32 %v153, 30
    %v155 = vshll.u32 %v154, 30
    %v156 = vsub.s32 %v152, %v155
    %vm157 = vcmp.lt.s32.totalorder %v156, 0
    %v158 = vsub.s32 0, %v156
    %v159 = vsel %vm157, %v158, %v156
    %v160 = vclz %v159
    %v161 = vsub.s32 %v160, 2
    %vm162 = vcmp.gt.s32.totalorder 0, %v161
    %v163 = vsel %vm162, 0, %v161
    %v164 = vsub.s32 32, %v163
    %v165 = vshll.u32 %v156, %v163
    %v166 = vshrl.u32 %v148, %v164
    %v167 = vor.u32 %v165, %v166
    %v168 = vsub.s32 4294967266, %v163
    %v169 = vadd.s32 %v168, 127
    %v170 = vshll.u32 %v169, 23
    %v171 = vor.u32 4788187, %v170
    %v172 = vand.u32 2147483647, %v171
    %v174 = vcvt.s32.f32 %v167
    %v175 = vmul.f32 %v174, %v172
    %v176 = vxor.u32 %v175, 2147483648
    %v177 = vsel %vm56, %v176, %v175
    %v178 = vsub.s32 4, %v154
    %v179 = vsel %vm56, %v178, %v154
    %v180 = vsel %vm55, %v52, %v177
    %v181 = vsel %vm55, 0, %v179
    %v182 = vmul.f32 %v180, %v180
    %v183 = vmul.f32 %v182, -0.001358992
    %v184 = vadd.f32 %v183, 0.041655596
    %v185 = vmul.f32 %v182, %v184
    %v186 = vadd.f32 %v185, -0.4999988
    %v187 = vmul.f32 %v182, %v186
    %v188 = vadd.f32 1.0, %v187
    %v189 = vmul.f32 %v180, %v180
    %v190 = vmul.f32 %v189, -0.00019511016
    %v191 = vadd.f32 %v190, 0.008332121
    %v192 = vmul.f32 %v189, %v191
    %v193 = vadd.f32 %v192, -0.16666654
    %v194 = vmul.f32 %v189, %v193
    %v195 = vadd.f32 %v194, 1.0
    %v196 = vmul.f32 %v195, %v180
    %vm197 = vweird.f32 %v52
    %v198 = vadd.s32 %v181, 3
    %v199 = vand.u32 %v198, 3
    %vm200 = vcmp.lt.s32.totalorder %v199, 2
    %vm201 = vcmp.eq.s32.totalorder %v199, 0
    %v202 = vxor.u32 %v196, 2147483648
    %v203 = vsel %vm201, %v188, %v202
    %vm204 = vcmp.eq.s32.totalorder %v199, 2
    %v205 = vxor.u32 %v188, 2147483648
    %v206 = vsel %vm204, %v205, %v196
    %v207 = vsel %vm200, %v203, %v206
    %v208 = vsel %vm197, nan, %v207
    %v209 = vand.u32 2147483647, %v53
    %vm210 = vcmp.le.f32.partialorder %v209, 0.7853982
    %vm211 = vcmp.lt.s32.totalorder %v53, 0
    %v212 = vand.u32 %v53, 2139095040
    %v213 = vshrl.u32 %v212, 23
    %v214 = vsub.s32 %v213, 127
    %v215 = vand.u32 2147483647, %v53
    %v216 = vand.u32 %v215, 8388607
    %v217 = vor.u32 %v216, 8388608
    %v218 = vsub.s32 0, %v217
    %v219 = vadd.s32 %v214, 1
    %vm220 = vcmp.gt.s32.totalorder %v219, 0
    %v221 = vsel %vm220, %v219, 0
    %v222 = vshrl.u32 %v221, 5
    %v223 = vand.u32 %v221, 31
    %v224 = vsub.s32 32, %v223
    %v225 = vshrl.u32 683565275, %v224
    %v226 = vshll.u32 683565275, %v223
    %v227 = vshrl.u32 2475754826, %v224
    %v228 = vor.u32 %v226, %v227
    %v229 = vshll.u32 2475754826, %v223
    %v230 = vshrl.u32 2131351028, %v224
    %v231 = vor.u32 %v229, %v230
    %v232 = vshll.u32 2131351028, %v223
    %v233 = vshrl.u32 2102212464, %v224
    %v234 = vor.u32 %v232, %v233
    %v235 = vshll.u32 2102212464, %v223
    %v236 = vshrl.u32 920167782, %v224
    %v237 = vor.u32 %v235, %v236
    %v238 = vshll.u32 920167782, %v223
    %v239 = vshrl.u32 1326507024, %v224
    %v240 = vor.u32 %v238, %v239
    %vm241 = vcmp.lt.s32.totalorder %v222, 1
    %vm242 = vcmp.lt.s32.totalorder %v222, 2
    %vm243 = vcmp.lt.s32.totalorder %v222, 3
    %vm244 = vcmp.lt.s32.totalorder %v222, 4
    %v245 = vsel %vm241, %v225, %v228
    %v246 = vsel %vm244, %v234, 2102212464
    %v247 = vsel %vm243, %v231, %v246
    %v248 = vsel %vm242, %v245, %v247
    %v249 = vsel %vm241, %v228, %v231
    %v250 = vsel %vm244, %v237, 920167782
    %v251 = vsel %vm243, %v234, %v250
    %v252 = vsel %vm242, %v249, %v251
    %v253 = vsel %vm241, %v231, %v234
    %v254 = vsel %vm244, %v240, 1326507024
    %v255 = vsel %vm243, %v237, %v254
    %v256 = vsel %vm242, %v253, %v255
    %v257 = vshll.u32 %v217, 8
    %v258 = vand.u32 %v257, 65535
    %v259 = vshrl.u32 %v257, 16
    %v260 = vand.u32 %v256, 65535
    %v261 = vshrl.u32 %v256, 16
    %v262 = vmul.u32 %v258, %v260
    %v263 = vmul.u32 %v258, %v261
    %v264 = vmul.u32 %v259, %v260
    %v265 = vmul.u32 %v259, %v261
    %v266 = vshll.u32 %v263, 16
    %v267 = vshrl.u32 %v263, 16
    %v268 = vshll.u32 %v264, 16
    %v269 = vshrl.u32 %v264, 16
    %vm270 = vc.u32 %v262, %v266
    %v271 = vsel %vm270, 1, 0
    %v272 = vadd.s32 %v262, %v266
    %v273 = vadd.s32 %v265, %v271
    %vm274 = vc.u32 %v272, %v268
    %v275 = vsel %vm274, 1, 0
    %v276 = vadd.s32 %v272, %v268
    %v277 = vadd.s32 %v273, %v275
    %v278 = vadd.s32 %v277, %v267
    %v279 = vadd.s32 %v278, %v269
    %v280 = vand.u32 %v257, 65535
    %v281 = vshrl.u32 %v257, 16
    %v282 = vand.u32 %v252, 65535
    %v283 = vshrl.u32 %v252, 16
    %v284 = vmul.u32 %v280, %v282
    %v285 = vmul.u32 %v280, %v283
    %v286 = vmul.u32 %v281, %v282
    %v287 = vmul.u32 %v281, %v283
    %v288 = vshll.u32 %v285, 16
    %v289 = vshrl.u32 %v285, 16
    %v290 = vshll.u32 %v286, 16
    %v291 = vshrl.u32 %v286, 16
    %vm292 = vc.u32 %v284, %v288
    %v293 = vsel %vm292, 1, 0
    %v294 = vadd.s32 %v284, %v288
    %v295 = vadd.s32 %v287, %v293
    %vm296 = vc.u32 %v294, %v290
    %v297 = vsel %vm296, 1, 0
    %v298 = vadd.s32 %v294, %v290
    %v299 = vadd.s32 %v295, %v297
    %v300 = vadd.s32 %v299, %v289
    %v301 = vadd.s32 %v300, %v291
    %v302 = vmul.u32 %v257, %v248
    %v303 = vadd.s32 %v279, %v298
    %vm304 = vc.u32 %v279, %v298
    %v305 = vadd.s32 %v301, 1
    %v306 = vsel %vm304, %v305, %v301
    %v307 = vadd.s32 %v302, %v306
    %v308 = vadd.s32 %v307, 536870912
    %v309 = vshrl.u32 %v308, 30
    %v310 = vshll.u32 %v309, 30
    %v311 = vsub.s32 %v307, %v310
    %vm312 = vcmp.lt.s32.totalorder %v311, 0
    %v313 = vsub.s32 0, %v311
    %v314 = vsel %vm312, %v313, %v311
    %v315 = vclz %v314
    %v316 = vsub.s32 %v315, 2
    %vm317 = vcmp.gt.s32.totalorder 0, %v316
    %v318 = vsel %vm317, 0, %v316
    %v319 = vsub.s32 32, %v318
    %v320 = vshll.u32 %v311, %v318
    %v321 = vshrl.u32 %v303, %v319
    %v322 = vor.u32 %v320, %v321
    %v323 = vsub.s32 4294967266, %v318
    %v324 = vadd.s32 %v323, 127
    %v325 = vshll.u32 %v324, 23
    %v326 = vor.u32 4788187, %v325
    %v327 = vand.u32 2147483647, %v326
    %v329 = vcvt.s32.f32 %v322
    %v330 = vmul.f32 %v329, %v327
    %v331 = vxor.u32 %v330, 2147483648
    %v332 = vsel %vm211, %v331, %v330
    %v333 = vsub.s32 4, %v309
    %v334 = vsel %vm211, %v333, %v309
    %v335 = vsel %vm210, %v53, %v332
    %v336 = vsel %vm210, 0, %v334
    %v337 = vmul.f32 %v335, %v335
    %v338 = vmul.f32 %v337, -0.001358992
    %v339 = vadd.f32 %v338, 0.041655596
    %v340 = vmul.f32 %v337, %v339
    %v341 = vadd.f32 %v340, -0.4999988
    %v342 = vmul.f32 %v337, %v341
    %v343 = vadd.f32 1.0, %v342
    %v344 = vmul.f32 %v335, %v335
    %v345 = vmul.f32 %v344, -0.00019511016
    %v346 = vadd.f32 %v345, 0.008332121
    %v347 = vmul.f32 %v344, %v346
    %v348 = vadd.f32 %v347, -0.16666654
    %v349 = vmul.f32 %v344, %v348
    %v350 = vadd.f32 %v349, 1.0
    %v351 = vmul.f32 %v350, %v335
    %vm352 = vweird.f32 %v53
    %v353 = vadd.s32 %v336, 3
    %v354 = vand.u32 %v353, 3
    %vm355 = vcmp.lt.s32.totalorder %v354, 2
    %vm356 = vcmp.eq.s32.totalorder %v354, 0
    %v357 = vxor.u32 %v351, 2147483648
    %v358 = vsel %vm356, %v343, %v357
    %vm359 = vcmp.eq.s32.totalorder %v354, 2
    %v360 = vxor.u32 %v343, 2147483648
    %v361 = vsel %vm359, %v360, %v351
    %v362 = vsel %vm355, %v358, %v361
    %v363 = vsel %vm352, nan, %v362
    %v364 = vmul.f32 %v208, %v42
    %v365 = vmul.f32 %v363, %v43
    %vm366 = vcmask 130048
    %367 = vst.msk [vmem:[#allocation5] sm:$0xff] %vm366, %v364
    %368 = vst.msk [vmem:[#allocation5 + $0x8] sm:$0xff] %vm366, %v365
    %v369 = vand.u32 2147483647, %v52
    %vm370 = vcmp.le.f32.partialorder %v369, 0.7853982
    %vm371 = vcmp.lt.s32.totalorder %v52, 0
    %v372 = vand.u32 %v52, 2139095040
    %v373 = vshrl.u32 %v372, 23
    %v374 = vsub.s32 %v373, 127
    %v375 = vand.u32 2147483647, %v52
    %v376 = vand.u32 %v375, 8388607
    %v377 = vor.u32 %v376, 8388608
    %v378 = vsub.s32 0, %v377
    %v379 = vadd.s32 %v374, 1
    %vm380 = vcmp.gt.s32.totalorder %v379, 0
    %v381 = vsel %vm380, %v379, 0
    %v382 = vshrl.u32 %v381, 5
    %v383 = vand.u32 %v381, 31
    %v384 = vsub.s32 32, %v383
    %v385 = vshrl.u32 683565275, %v384
    %v386 = vshll.u32 683565275, %v383
    %v387 = vshrl.u32 2475754826, %v384
    %v388 = vor.u32 %v386, %v387
    %v389 = vshll.u32 2475754826, %v383
    %v390 = vshrl.u32 2131351028, %v384
    %v391 = vor.u32 %v389, %v390
    %v392 = vshll.u32 2131351028, %v383
    %v393 = vshrl.u32 2102212464, %v384
    %v394 = vor.u32 %v392, %v393
    %v395 = vshll.u32 2102212464, %v383
    %v396 = vshrl.u32 920167782, %v384
    %v397 = vor.u32 %v395, %v396
    %v398 = vshll.u32 920167782, %v383
    %v399 = vshrl.u32 1326507024, %v384
    %v400 = vor.u32 %v398, %v399
    %vm401 = vcmp.lt.s32.totalorder %v382, 1
    %vm402 = vcmp.lt.s32.totalorder %v382, 2
    %vm403 = vcmp.lt.s32.totalorder %v382, 3
    %vm404 = vcmp.lt.s32.totalorder %v382, 4
    %v405 = vsel %vm401, %v385, %v388
    %v406 = vsel %vm404, %v394, 2102212464
    %v407 = vsel %vm403, %v391, %v406
    %v408 = vsel %vm402, %v405, %v407
    %v409 = vsel %vm401, %v388, %v391
    %v410 = vsel %vm404, %v397, 920167782
    %v411 = vsel %vm403, %v394, %v410
    %v412 = vsel %vm402, %v409, %v411
    %v413 = vsel %vm401, %v391, %v394
    %v414 = vsel %vm404, %v400, 1326507024
    %v415 = vsel %vm403, %v397, %v414
    %v416 = vsel %vm402, %v413, %v415
    %v417 = vshll.u32 %v377, 8
    %v418 = vand.u32 %v417, 65535
    %v419 = vshrl.u32 %v417, 16
    %v420 = vand.u32 %v416, 65535
    %v421 = vshrl.u32 %v416, 16
    %v422 = vmul.u32 %v418, %v420
    %v423 = vmul.u32 %v418, %v421
    %v424 = vmul.u32 %v419, %v420
    %v425 = vmul.u32 %v419, %v421
    %v426 = vshll.u32 %v423, 16
    %v427 = vshrl.u32 %v423, 16
    %v428 = vshll.u32 %v424, 16
    %v429 = vshrl.u32 %v424, 16
    %vm430 = vc.u32 %v422, %v426
    %v431 = vsel %vm430, 1, 0
    %v432 = vadd.s32 %v422, %v426
    %v433 = vadd.s32 %v425, %v431
    %vm434 = vc.u32 %v432, %v428
    %v435 = vsel %vm434, 1, 0
    %v436 = vadd.s32 %v432, %v428
    %v437 = vadd.s32 %v433, %v435
    %v438 = vadd.s32 %v437, %v427
    %v439 = vadd.s32 %v438, %v429
    %v440 = vand.u32 %v417, 65535
    %v441 = vshrl.u32 %v417, 16
    %v442 = vand.u32 %v412, 65535
    %v443 = vshrl.u32 %v412, 16
    %v444 = vmul.u32 %v440, %v442
    %v445 = vmul.u32 %v440, %v443
    %v446 = vmul.u32 %v441, %v442
    %v447 = vmul.u32 %v441, %v443
    %v448 = vshll.u32 %v445, 16
    %v449 = vshrl.u32 %v445, 16
    %v450 = vshll.u32 %v446, 16
    %v451 = vshrl.u32 %v446, 16
    %vm452 = vc.u32 %v444, %v448
    %v453 = vsel %vm452, 1, 0
    %v454 = vadd.s32 %v444, %v448
    %v455 = vadd.s32 %v447, %v453
    %vm456 = vc.u32 %v454, %v450
    %v457 = vsel %vm456, 1, 0
    %v458 = vadd.s32 %v454, %v450
    %v459 = vadd.s32 %v455, %v457
    %v460 = vadd.s32 %v459, %v449
    %v461 = vadd.s32 %v460, %v451
    %v462 = vmul.u32 %v417, %v408
    %v463 = vadd.s32 %v439, %v458
    %vm464 = vc.u32 %v439, %v458
    %v465 = vadd.s32 %v461, 1
    %v466 = vsel %vm464, %v465, %v461
    %v467 = vadd.s32 %v462, %v466
    %v468 = vadd.s32 %v467, 536870912
    %v469 = vshrl.u32 %v468, 30
    %v470 = vshll.u32 %v469, 30
    %v471 = vsub.s32 %v467, %v470
    %vm472 = vcmp.lt.s32.totalorder %v471, 0
    %v473 = vsub.s32 0, %v471
    %v474 = vsel %vm472, %v473, %v471
    %v475 = vclz %v474
    %v476 = vsub.s32 %v475, 2
    %vm477 = vcmp.gt.s32.totalorder 0, %v476
    %v478 = vsel %vm477, 0, %v476
    %v479 = vsub.s32 32, %v478
    %v480 = vshll.u32 %v471, %v478
    %v481 = vshrl.u32 %v463, %v479
    %v482 = vor.u32 %v480, %v481
    %v483 = vsub.s32 4294967266, %v478
    %v484 = vadd.s32 %v483, 127
    %v485 = vshll.u32 %v484, 23
    %v486 = vor.u32 4788187, %v485
    %v487 = vand.u32 2147483647, %v486
    %v489 = vcvt.s32.f32 %v482
    %v490 = vmul.f32 %v489, %v487
    %v491 = vxor.u32 %v490, 2147483648
    %v492 = vsel %vm371, %v491, %v490
    %v493 = vsub.s32 4, %v469
    %v494 = vsel %vm371, %v493, %v469
    %v495 = vsel %vm370, %v52, %v492
    %v496 = vsel %vm370, 0, %v494
    %v497 = vmul.f32 %v495, %v495
    %v498 = vmul.f32 %v497, -0.001358992
    %v499 = vadd.f32 %v498, 0.041655596
    %v500 = vmul.f32 %v497, %v499
    %v501 = vadd.f32 %v500, -0.4999988
    %v502 = vmul.f32 %v497, %v501
    %v503 = vadd.f32 1.0, %v502
    %v504 = vmul.f32 %v495, %v495
    %v505 = vmul.f32 %v504, -0.00019511016
    %v506 = vadd.f32 %v505, 0.008332121
    %v507 = vmul.f32 %v504, %v506
    %v508 = vadd.f32 %v507, -0.16666654
    %v509 = vmul.f32 %v504, %v508
    %v510 = vadd.f32 %v509, 1.0
    %v511 = vmul.f32 %v510, %v495
    %vm512 = vweird.f32 %v52
    %v513 = vand.u32 %v496, 3
    %vm514 = vcmp.lt.s32.totalorder %v513, 2
    %vm515 = vcmp.eq.s32.totalorder %v513, 0
    %v516 = vxor.u32 %v511, 2147483648
    %v517 = vsel %vm515, %v503, %v516
    %vm518 = vcmp.eq.s32.totalorder %v513, 2
    %v519 = vxor.u32 %v503, 2147483648
    %v520 = vsel %vm518, %v519, %v511
    %v521 = vsel %vm514, %v517, %v520
    %v522 = vsel %vm512, nan, %v521
    %v523 = vand.u32 2147483647, %v53
    %vm524 = vcmp.le.f32.partialorder %v523, 0.7853982
    %vm525 = vcmp.lt.s32.totalorder %v53, 0
    %v526 = vand.u32 %v53, 2139095040
    %v527 = vshrl.u32 %v526, 23
    %v528 = vsub.s32 %v527, 127
    %v529 = vand.u32 2147483647, %v53
    %v530 = vand.u32 %v529, 8388607
    %v531 = vor.u32 %v530, 8388608
    %v532 = vsub.s32 0, %v531
    %v533 = vadd.s32 %v528, 1
    %vm534 = vcmp.gt.s32.totalorder %v533, 0
    %v535 = vsel %vm534, %v533, 0
    %v536 = vshrl.u32 %v535, 5
    %v537 = vand.u32 %v535, 31
    %v538 = vsub.s32 32, %v537
    %v539 = vshrl.u32 683565275, %v538
    %v540 = vshll.u32 683565275, %v537
    %v541 = vshrl.u32 2475754826, %v538
    %v542 = vor.u32 %v540, %v541
    %v543 = vshll.u32 2475754826, %v537
    %v544 = vshrl.u32 2131351028, %v538
    %v545 = vor.u32 %v543, %v544
    %v546 = vshll.u32 2131351028, %v537
    %v547 = vshrl.u32 2102212464, %v538
    %v548 = vor.u32 %v546, %v547
    %v549 = vshll.u32 2102212464, %v537
    %v550 = vshrl.u32 920167782, %v538
    %v551 = vor.u32 %v549, %v550
    %v552 = vshll.u32 920167782, %v537
    %v553 = vshrl.u32 1326507024, %v538
    %v554 = vor.u32 %v552, %v553
    %vm555 = vcmp.lt.s32.totalorder %v536, 1
    %vm556 = vcmp.lt.s32.totalorder %v536, 2
    %vm557 = vcmp.lt.s32.totalorder %v536, 3
    %vm558 = vcmp.lt.s32.totalorder %v536, 4
    %v559 = vsel %vm555, %v539, %v542
    %v560 = vsel %vm558, %v548, 2102212464
    %v561 = vsel %vm557, %v545, %v560
    %v562 = vsel %vm556, %v559, %v561
    %v563 = vsel %vm555, %v542, %v545
    %v564 = vsel %vm558, %v551, 920167782
    %v565 = vsel %vm557, %v548, %v564
    %v566 = vsel %vm556, %v563, %v565
    %v567 = vsel %vm555, %v545, %v548
    %v568 = vsel %vm558, %v554, 1326507024
    %v569 = vsel %vm557, %v551, %v568
    %v570 = vsel %vm556, %v567, %v569
    %v571 = vshll.u32 %v531, 8
    %v572 = vand.u32 %v571, 65535
    %v573 = vshrl.u32 %v571, 16
    %v574 = vand.u32 %v570, 65535
    %v575 = vshrl.u32 %v570, 16
    %v576 = vmul.u32 %v572, %v574
    %v577 = vmul.u32 %v572, %v575
    %v578 = vmul.u32 %v573, %v574
    %v579 = vmul.u32 %v573, %v575
    %v580 = vshll.u32 %v577, 16
    %v581 = vshrl.u32 %v577, 16
    %v582 = vshll.u32 %v578, 16
    %v583 = vshrl.u32 %v578, 16
    %vm584 = vc.u32 %v576, %v580
    %v585 = vsel %vm584, 1, 0
    %v586 = vadd.s32 %v576, %v580
    %v587 = vadd.s32 %v579, %v585
    %vm588 = vc.u32 %v586, %v582
    %v589 = vsel %vm588, 1, 0
    %v590 = vadd.s32 %v586, %v582
    %v591 = vadd.s32 %v587, %v589
    %v592 = vadd.s32 %v591, %v581
    %v593 = vadd.s32 %v592, %v583
    %v594 = vand.u32 %v571, 65535
    %v595 = vshrl.u32 %v571, 16
    %v596 = vand.u32 %v566, 65535
    %v597 = vshrl.u32 %v566, 16
    %v598 = vmul.u32 %v594, %v596
    %v599 = vmul.u32 %v594, %v597
    %v600 = vmul.u32 %v595, %v596
    %v601 = vmul.u32 %v595, %v597
    %v602 = vshll.u32 %v599, 16
    %v603 = vshrl.u32 %v599, 16
    %v604 = vshll.u32 %v600, 16
    %v605 = vshrl.u32 %v600, 16
    %vm606 = vc.u32 %v598, %v602
    %v607 = vsel %vm606, 1, 0
    %v608 = vadd.s32 %v598, %v602
    %v609 = vadd.s32 %v601, %v607
    %vm610 = vc.u32 %v608, %v604
    %v611 = vsel %vm610, 1, 0
    %v612 = vadd.s32 %v608, %v604
    %v613 = vadd.s32 %v609, %v611
    %v614 = vadd.s32 %v613, %v603
    %v615 = vadd.s32 %v614, %v605
    %v616 = vmul.u32 %v571, %v562
    %v617 = vadd.s32 %v593, %v612
    %vm618 = vc.u32 %v593, %v612
    %v619 = vadd.s32 %v615, 1
    %v620 = vsel %vm618, %v619, %v615
    %v621 = vadd.s32 %v616, %v620
    %v622 = vadd.s32 %v621, 536870912
    %v623 = vshrl.u32 %v622, 30
    %v624 = vshll.u32 %v623, 30
    %v625 = vsub.s32 %v621, %v624
    %vm626 = vcmp.lt.s32.totalorder %v625, 0
    %v627 = vsub.s32 0, %v625
    %v628 = vsel %vm626, %v627, %v625
    %v629 = vclz %v628
    %v630 = vsub.s32 %v629, 2
    %vm631 = vcmp.gt.s32.totalorder 0, %v630
    %v632 = vsel %vm631, 0, %v630
    %v633 = vsub.s32 32, %v632
    %v634 = vshll.u32 %v625, %v632
    %v635 = vshrl.u32 %v617, %v633
    %v636 = vor.u32 %v634, %v635
    %v637 = vsub.s32 4294967266, %v632
    %v638 = vadd.s32 %v637, 127
    %v639 = vshll.u32 %v638, 23
    %v640 = vor.u32 4788187, %v639
    %v641 = vand.u32 2147483647, %v640
    %v643 = vcvt.s32.f32 %v636
    %v644 = vmul.f32 %v643, %v641
    %v645 = vxor.u32 %v644, 2147483648
    %v646 = vsel %vm525, %v645, %v644
    %v647 = vsub.s32 4, %v623
    %v648 = vsel %vm525, %v647, %v623
    %v649 = vsel %vm524, %v53, %v646
    %v650 = vsel %vm524, 0, %v648
    %v651 = vmul.f32 %v649, %v649
    %v652 = vmul.f32 %v651, -0.001358992
    %v653 = vadd.f32 %v652, 0.041655596
    %v654 = vmul.f32 %v651, %v653
    %v655 = vadd.f32 %v654, -0.4999988
    %v656 = vmul.f32 %v651, %v655
    %v657 = vadd.f32 1.0, %v656
    %v658 = vmul.f32 %v649, %v649
    %v659 = vmul.f32 %v658, -0.00019511016
    %v660 = vadd.f32 %v659, 0.008332121
    %v661 = vmul.f32 %v658, %v660
    %v662 = vadd.f32 %v661, -0.16666654
    %v663 = vmul.f32 %v658, %v662
    %v664 = vadd.f32 %v663, 1.0
    %v665 = vmul.f32 %v664, %v649
    %vm666 = vweird.f32 %v53
    %v667 = vand.u32 %v650, 3
    %vm668 = vcmp.lt.s32.totalorder %v667, 2
    %vm669 = vcmp.eq.s32.totalorder %v667, 0
    %v670 = vxor.u32 %v665, 2147483648
    %v671 = vsel %vm669, %v657, %v670
    %vm672 = vcmp.eq.s32.totalorder %v667, 2
    %v673 = vxor.u32 %v657, 2147483648
    %v674 = vsel %vm672, %v673, %v665
    %v675 = vsel %vm668, %v671, %v674
    %v676 = vsel %vm666, nan, %v675
    %v677 = vmul.f32 %v522, %v42
    %v678 = vmul.f32 %v676, %v43
    %681 = vrot.lane.b32.xlu0 %v677, 16
    %v682 = vpop.permute.xlu0 %681
    %683 = vrot.lane.b32.xlu0 %v678, 16
    %v684 = vpop.permute.xlu0 %683
    %vm687 = vcmask 261248
    %688 = vst.msk [vmem:[#allocation5] sm:$0xff] %vm687, %v682
    %689 = vst.msk [vmem:[#allocation5 + $0x8] sm:$0xff] %vm687, %v684
    // Predicated region
    $region10: #{tpu_custom_call.1} parent=1 // pred_check
      _
    $region11: #{tpu_custom_call.1} parent=1 // pred_check_branch
      %691 = sbr.rel (0) target = $region13
    $region12: #{tpu_custom_call.1} parent=1 // pred_region
      %693 = vsyncadd [#allocation4], 0
      %s694 = sshll.u32 [#allocation5], 4
      %s695 = int_to_ptr.vmem [resolvable:$true] %s694
      %s696 = sshll.u32 %s1, 4
      %s697 = int_to_ptr.hbm [resolvable:$true] %s696
      %702 = dma.vmem_to_hbm [thread:$0]  %s695, 256, %s697, [#allocation4], 128, 128, 8
    $region13: #{tpu_custom_call.1} parent=1 // pred_fallthru
      _
    // Predicated region
    $region14: #{tpu_custom_call.1} parent=1 // pred_check
      _
    $region15: #{tpu_custom_call.1} parent=1 // pred_check_branch
      %704 = sbr.rel (0) target = $region17
    $region16: #{tpu_custom_call.1} parent=1 // pred_region
      %706 = dma.done [#allocation4], 256
    $region17: #{tpu_custom_call.1} parent=1 // pred_fallthru
      _
    %707 = vsyncpa [#allocation3], 1
    %708 = vsyncpa [#allocation4], 1

</llo_original>
